<compile_context>
chip_gen: v5e
topology: v5e:2x2
jax: 0.10.0
libtpu: 0.0.40
codegen_flags: <defaults>
</compile_context>

<pallas_src>
import functools

import jax
import jax.numpy as jnp
from jax.experimental import pallas as pl
from jax.experimental.pallas import tpu as pltpu


_VMEM_LIMIT = 48 * 1024 * 1024   # <= v7x 64 MiB physical, plenty on v5e/v6e
_TILE_TARGET = 512               # lane-dim tile cap (multiple of 128)
_MAX_SINGLE_BLOCK = 512          # max feature width kept as a single block


# ---------------------------------------------------------------------------
# Tiling / padding helpers
# ---------------------------------------------------------------------------
def _round_up(x, m):
    return ((x + m - 1) // m) * m


def _tile_and_pad(dim, target=_TILE_TARGET):
    """Pad `dim` to a multiple of 128, then pick the largest tile <= target
    (multiple of 128) that evenly divides the padded dim."""
    pad = _round_up(dim, 128)
    t = (min(target, pad) // 128) * 128
    while pad % t:
        t -= 128
    return t, pad


def _row_tile(n_pad, target=_TILE_TARGET):
    """Row (sublane) tile: multiple of 8 dividing n_pad. Prefer >= 2 row
    blocks so the 'parallel' axis feeds both v7x TensorCores."""
    cap = min(target, n_pad)
    if n_pad >= 16:
        cap = min(cap, max(n_pad // 2, 8))
    t = max((cap // 8) * 8, 8)
    while n_pad % t:
        t -= 8
    return t


def _pad2d(x, rows, cols, dtype):
    r, c = x.shape
    return jnp.pad(x, ((0, rows - r), (0, cols - c))).astype(dtype)


def _nonzero_block_map(a_f32, tm, tk):
    """Per row-block list of nonzero column-block indices of A_hat.

    Returns (kmap, kcnt) int32 arrays of shapes (nbm, nbk) / (nbm,).  Entries
    beyond kcnt are clamped to the last valid block so the Pallas pipeline
    sees a repeated block index and skips the DMA."""
    n_pad = a_f32.shape[0]
    nbm, nbk = n_pad // tm, n_pad // tk
    nz = jnp.any(a_f32.reshape(nbm, tm, nbk, tk) != 0, axis=(1, 3))   # (nbm,nbk)
    cnt = jnp.sum(nz, axis=1).astype(jnp.int32)
    order = jnp.argsort(jnp.logical_not(nz), axis=1).astype(jnp.int32)  # nz first
    pos = jnp.arange(nbk, dtype=jnp.int32)[None, :]
    last = jnp.take_along_axis(order, jnp.maximum(cnt - 1, 0)[:, None], axis=1)
    kmap = jnp.where(pos < cnt[:, None], order, last)
    return kmap, cnt


# ---------------------------------------------------------------------------
# Generic tiled matmul kernels (feature transforms / fallbacks)
# ---------------------------------------------------------------------------
def _matmul_direct_kernel(*refs, apply_relu, has_bias):
    # single K block: write the output directly, no scratch accumulator
    if has_bias:
        a_ref, b_ref, bias_ref, o_ref = refs
    else:
        a_ref, b_ref, o_ref = refs
    r = jnp.dot(a_ref[...], b_ref[...], preferred_element_type=jnp.float32)
    if has_bias:
        r = r + bias_ref[...]
    if apply_relu:
        r = jnp.maximum(r, 0.0)
    o_ref[...] = r.astype(o_ref.dtype)


def _matmul_acc_kernel(*refs, apply_relu, has_bias):
    # multi K block: f32 VMEM accumulator resident across the last grid axis
    if has_bias:
        a_ref, b_ref, bias_ref, o_ref, acc_ref = refs
    else:
        a_ref, b_ref, o_ref, acc_ref = refs

    @pl.when(pl.program_id(2) == 0)
    def _():
        acc_ref[...] = jnp.zeros_like(acc_ref)

    acc_ref[...] += jnp.dot(a_ref[...], b_ref[...],
                            preferred_element_type=jnp.float32)

    @pl.when(pl.program_id(2) == pl.num_programs(2) - 1)
    def _():
        r = acc_ref[...]
        if has_bias:
            r = r + bias_ref[...]
        if apply_relu:
            r = jnp.maximum(r, 0.0)
        o_ref[...] = r.astype(o_ref.dtype)


def _tiled_matmul(a, b, bias=None, *, tm, tn, tk, apply_relu=False,
                  out_dtype=jnp.bfloat16):
    m, k = a.shape
    _, n = b.shape
    has_bias = bias is not None
    nk = k // tk
    operands = [a, b] + ([bias] if has_bias else [])

    if nk == 1:
        grid = (m // tm, n // tn)
        in_specs = [pl.BlockSpec((tm, k), lambda i, j: (i, 0)),
                    pl.BlockSpec((k, tn), lambda i, j: (0, j))]
        if has_bias:
            in_specs.append(pl.BlockSpec((1, tn), lambda i, j: (0, j)))
        out_specs = pl.BlockSpec((tm, tn), lambda i, j: (i, j))
        kernel = functools.partial(_matmul_direct_kernel,
                                   apply_relu=apply_relu, has_bias=has_bias)
        scratch = []
        sem = ("parallel", "parallel")
    else:
        grid = (m // tm, n // tn, nk)
        in_specs = [pl.BlockSpec((tm, tk), lambda i, j, kk: (i, kk)),
                    pl.BlockSpec((tk, tn), lambda i, j, kk: (kk, j))]
        if has_bias:
            in_specs.append(pl.BlockSpec((1, tn), lambda i, j, kk: (0, j)))
        out_specs = pl.BlockSpec((tm, tn), lambda i, j, kk: (i, j))
        kernel = functools.partial(_matmul_acc_kernel,
                                   apply_relu=apply_relu, has_bias=has_bias)
        scratch = [pltpu.VMEM((tm, tn), jnp.float32)]
        sem = ("parallel", "parallel", "arbitrary")

    return pl.pallas_call(
        kernel,
        out_shape=jax.ShapeDtypeStruct((m, n), out_dtype),
        grid_spec=pltpu.PrefetchScalarGridSpec(
            num_scalar_prefetch=0,
            grid=grid,
            in_specs=in_specs,
            out_specs=out_specs,
            scratch_shapes=scratch),
        compiler_params=pltpu.CompilerParams(
            dimension_semantics=sem,
            vmem_limit_bytes=_VMEM_LIMIT),
    )(*operands)


# ---------------------------------------------------------------------------
# Aggregation kernel: OUT_block = epilogue( sum_k A[i,k] @ X[k] )
#   * skips all-zero A_hat tiles via scalar-prefetched (kmap, kcnt)
#   * optional fused second matmul with a VMEM-resident W2 in the epilogue
# ---------------------------------------------------------------------------
def _agg_kernel(kmap_ref, kcnt_ref, a_ref, x_ref, bias_ref, *rest,
                apply_relu, fuse_w2):
    if fuse_w2:
        w2_ref, o_ref, acc_ref = rest
    else:
        o_ref, acc_ref = rest

    i = pl.program_id(0)
    k = pl.program_id(1)

    @pl.when(k == 0)
    def _():
        acc_ref[...] = jnp.zeros_like(acc_ref)

    @pl.when(k < kcnt_ref[i])        # skip all-zero A_hat column blocks
    def _():
        acc_ref[...] += jnp.dot(a_ref[...], x_ref[...],
                                preferred_element_type=jnp.float32)

    @pl.when(k == pl.num_programs(1) - 1)
    def _():
        r = acc_ref[...] + bias_ref[...]
        if apply_relu:
            r = jnp.maximum(r, 0.0)
        if fuse_w2:
            r = jnp.dot(r.astype(w2_ref.dtype), w2_ref[...],
                        preferred_element_type=jnp.float32)
        o_ref[...] = r.astype(o_ref.dtype)


def _aggregate(a_bf16, x, bias, kmap, kcnt, *, tm, tk, w2=None,
               apply_relu=False, out_dtype=jnp.bfloat16):
    n_pad = a_bf16.shape[0]
    width = x.shape[1]
    nbm, nbk = n_pad // tm, n_pad // tk
    fuse = w2 is not None
    out_w = w2.shape[1] if fuse else width

    in_specs = [
        pl.BlockSpec((tm, tk), lambda i, k, km, kc: (i, km[i, k])),
        pl.BlockSpec((tk, width), lambda i, k, km, kc: (km[i, k], 0)),
        pl.BlockSpec((1, width), lambda i, k, km, kc: (0, 0)),
    ]
    operands = [kmap, kcnt, a_bf16, x, bias]
    if fuse:
        in_specs.append(pl.BlockSpec(w2.shape, lambda i, k, km, kc: (0, 0)))
        operands.append(w2)

    kernel = functools.partial(_agg_kernel, apply_relu=apply_relu, fuse_w2=fuse)
    return pl.pallas_call(
        kernel,
        out_shape=jax.ShapeDtypeStruct((n_pad, out_w), out_dtype),
        grid_spec=pltpu.PrefetchScalarGridSpec(
            num_scalar_prefetch=2,
            grid=(nbm, nbk),
            in_specs=in_specs,
            out_specs=pl.BlockSpec((tm, out_w), lambda i, k, km, kc: (i, 0)),
            scratch_shapes=[pltpu.VMEM((tm, width), jnp.float32)]),
        compiler_params=pltpu.CompilerParams(
            dimension_semantics=("parallel", "arbitrary"),
            vmem_limit_bytes=_VMEM_LIMIT),
    )(*operands)


# ---------------------------------------------------------------------------
# GCN forward
# ---------------------------------------------------------------------------
def gcn_forward_pallas(a_hat, x, w1, b1, w2, b2):
    n = x.shape[0]
    f_in, f_hid = w1.shape
    f_out = w2.shape[1]

    t_fin, fin_pad = _tile_and_pad(f_in)
    t_fhid, fhid_pad = _tile_and_pad(f_hid)
    t_fout, fout_pad = _tile_and_pad(f_out)
    t_nk, n_pad = _tile_and_pad(n)       # node dim as K (lane) in aggregations
    t_nr = _row_tile(n_pad)              # node dim as rows (sublane)

    bf16 = jnp.bfloat16
    a_f32 = _pad2d(a_hat, n_pad, n_pad, jnp.float32)
    a_p = a_f32.astype(bf16)
    x_p = _pad2d(x, n_pad, fin_pad, bf16)
    w1_p = _pad2d(w1, fin_pad, fhid_pad, bf16)
    w2_p = _pad2d(w2, fhid_pad, fout_pad, bf16)
    b1_p = _pad2d(b1.reshape(1, -1), 1, fhid_pad, jnp.float32)
    b2_p = _pad2d(b2.reshape(1, -1), 1, fout_pad, jnp.float32)

    # Per-row-block nonzero column-block map of A_hat (computed from f32 so no
    # nonzero block can be misclassified by the bf16 cast).
    kmap, kcnt = _nonzero_block_map(a_f32, t_nr, t_nk)

    # (1) XW1 = X @ W1  (no bias)
    xw1 = _tiled_matmul(x_p, w1_p, tm=t_nr, tn=t_fhid, tk=t_fin,
                        apply_relu=False, out_dtype=bf16)

    # (2+3) HW2 = relu(A_hat @ XW1 + b1) @ W2   (fused when widths fit)
    if fhid_pad <= _MAX_SINGLE_BLOCK and fout_pad <= _MAX_SINGLE_BLOCK:
        hw2 = _aggregate(a_p, xw1, b1_p, kmap, kcnt, tm=t_nr, tk=t_nk,
                         w2=w2_p, apply_relu=True, out_dtype=bf16)
    else:
        if fhid_pad <= _MAX_SINGLE_BLOCK:
            h = _aggregate(a_p, xw1, b1_p, kmap, kcnt, tm=t_nr, tk=t_nk,
                           apply_relu=True, out_dtype=bf16)
        else:
            h = _tiled_matmul(a_p, xw1, b1_p, tm=t_nr, tn=t_fhid, tk=t_nk,
                              apply_relu=True, out_dtype=bf16)
        hw2 = _tiled_matmul(h, w2_p, tm=t_nr, tn=t_fout, tk=t_fhid,
                            apply_relu=False, out_dtype=bf16)

    # (4) OUT = A_hat @ HW2 + b2
    if fout_pad <= _MAX_SINGLE_BLOCK:
        out = _aggregate(a_p, hw2, b2_p, kmap, kcnt, tm=t_nr, tk=t_nk,
                         apply_relu=False, out_dtype=jnp.float32)
    else:
        out = _tiled_matmul(a_p, hw2, b2_p, tm=t_nr, tn=t_fout, tk=t_nk,
                            apply_relu=False, out_dtype=jnp.float32)

    return out[:n, :f_out]


# ---------------------------------------------------------------------------
# Glue: edge_index -> dense symmetric-normalized adjacency.
# Matches torch_geometric gcn_norm: add_remaining_self_loops (nodes with an
# existing self-loop keep it; only missing ones get weight 1), then D^-1/2.
# ---------------------------------------------------------------------------
def build_normalized_adjacency(edge_index, num_nodes):
    src, dst = edge_index[0], edge_index[1]
    a = jnp.zeros((num_nodes, num_nodes), jnp.float32).at[dst, src].add(1.0)
    diag = jnp.diagonal(a)
    a = a + jnp.diag(jnp.where(diag > 0, 0.0, 1.0))
    deg = jnp.sum(a, axis=1)
    dinv = jnp.where(deg > 0, 1.0 / jnp.sqrt(deg), 0.0)
    return a * dinv[:, None] * dinv[None, :]


# ---------------------------------------------------------------------------
# Parameter init (deterministic, Glorot-uniform like GCNConv's default)
# ---------------------------------------------------------------------------
def init_params(key, in_c, hid_c, out_c):
    k1, k2 = jax.random.split(key)

    def glorot(k, fan_in, fan_out):
        limit = jnp.sqrt(6.0 / (fan_in + fan_out))
        return jax.random.uniform(k, (fan_in, fan_out), jnp.float32,
                                  -limit, limit)

    w1 = glorot(k1, in_c, hid_c)
    b1 = jnp.zeros((hid_c,), jnp.float32)
    w2 = glorot(k2, hid_c, out_c)
    b2 = jnp.zeros((out_c,), jnp.float32)
    return w1, b1, w2, b2


# ---------------------------------------------------------------------------
# References for correctness checks
# ---------------------------------------------------------------------------
def gcn_forward_ref_f32(a_hat, x, w1, b1, w2, b2):
    h = jnp.maximum(a_hat @ (x @ w1) + b1, 0.0)
    return a_hat @ (h @ w2) + b2


def gcn_forward_ref_bf16(a_hat, x, w1, b1, w2, b2):
    """Mirror the kernel's bf16-input / f32-accumulate staging."""
    bf = lambda t: t.astype(jnp.bfloat16)
    xw1 = jnp.dot(bf(x), bf(w1),
                  preferred_element_type=jnp.float32).astype(jnp.bfloat16)
    h = jnp.maximum(jnp.dot(bf(a_hat), xw1,
                            preferred_element_type=jnp.float32) + b1, 0.0)
    h = h.astype(jnp.bfloat16)
    hw2 = jnp.dot(h, bf(w2),
                  preferred_element_type=jnp.float32).astype(jnp.bfloat16)
    return jnp.dot(bf(a_hat), hw2, preferred_element_type=jnp.float32) + b2


if __name__ == "__main__":
    key = jax.random.PRNGKey(0)
    k_x, k_e, k_p = jax.random.split(key, 3)

    num_nodes = 16
    in_channels, hidden_channels, out_channels = 4, 32, 8
    num_edges = 40

    # node features [N, F_in]
    x = jax.random.normal(k_x, (num_nodes, in_channels), jnp.float32)
    # random edge_index [2, E]
    edge_index = jax.random.randint(k_e, (2, num_edges), 0, num_nodes,
                                    dtype=jnp.int32)

    a_hat = build_normalized_adjacency(edge_index, num_nodes)
    w1, b1, w2, b2 = init_params(k_p, in_channels, hidden_channels,
                                 out_channels)

    out = gcn_forward_pallas(a_hat, x, w1, b1, w2, b2)
    out = jax.block_until_ready(out)

    ref_bf16 = gcn_forward_ref_bf16(a_hat, x, w1, b1, w2, b2)
    ref_f32 = gcn_forward_ref_f32(a_hat, x, w1, b1, w2, b2)

    assert out.shape == (num_nodes, out_channels)
    assert jnp.allclose(out, ref_bf16, atol=5e-3, rtol=5e-3), \
        "mismatch vs bf16-staged reference"
    assert jnp.allclose(out, ref_f32, atol=5e-2, rtol=5e-2), \
        "mismatch vs f32 reference"

    print("KERNEL_OK")
</pallas_src>

<mosaic_0001>
module attributes {stable_mosaic.version = 11 : i64} {
  func.func @_matmul_direct_kernel(%arg0: i32, %arg1: i32, %arg2: memref<64x128xbf16, #tpu.memory_space<vmem>>, %arg3: memref<128x128xbf16, #tpu.memory_space<vmem>>, %arg4: memref<64x128xbf16, #tpu.memory_space<vmem>>) attributes {dimension_semantics = [#tpu.dimension_semantics<parallel>, #tpu.dimension_semantics<parallel>], iteration_bounds = array<i64: 2, 1>, scalar_prefetch = 0 : i64, scratch_operands = 0 : i64, tpu.core_type = #tpu.core_type<tc>, window_params = [{transform_indices = @transform_0, window_bounds = array<i64: 64, 128>}, {transform_indices = @transform_1, window_bounds = array<i64: 128, 128>}, {transform_indices = @transform_2, window_bounds = array<i64: 64, 128>}]} {
    %c0 = arith.constant 0 : index
    %c0_0 = arith.constant 0 : index
    %0 = vector.load %arg2[%c0, %c0_0] : memref<64x128xbf16, #tpu.memory_space<vmem>>, vector<64x128xbf16>
    %c0_1 = arith.constant 0 : index
    %c0_2 = arith.constant 0 : index
    %1 = vector.load %arg3[%c0_1, %c0_2] : memref<128x128xbf16, #tpu.memory_space<vmem>>, vector<128x128xbf16>
    %cst = arith.constant dense<0.000000e+00> : vector<64x128xf32>
    %2 = tpu.matmul %0, %1, %cst {dimension_numbers = #tpu.dot_dimension_numbers<[1], [0], [0], [1], [0, 0, 1, 1], [], []>} : vector<64x128xbf16>, vector<128x128xbf16>, vector<64x128xf32> -> vector<64x128xf32>
    %3 = arith.truncf %2 : vector<64x128xf32> to vector<64x128xbf16>
    %c0_3 = arith.constant 0 : index
    %c0_4 = arith.constant 0 : index
    %4 = vector.load %arg4[%c0_3, %c0_4] : memref<64x128xbf16, #tpu.memory_space<vmem>>, vector<64x128xbf16>
    tpu.vector_store %arg4[%c0_3, %c0_4], %3 {strides = array<i32>} : memref<64x128xbf16, #tpu.memory_space<vmem>>, vector<64x128xbf16>,
    return
  }
  func.func @transform_0(%arg0: i32, %arg1: i32) -> (i32, i32) {
    %c0_i32 = arith.constant 0 : i32
    %c0_i32_0 = arith.constant 0 : i32
    return %arg0, %c0_i32 : i32, i32
  }
  func.func @transform_1(%arg0: i32, %arg1: i32) -> (i32, i32) {
    %c0_i32 = arith.constant 0 : i32
    %c0_i32_0 = arith.constant 0 : i32
    return %c0_i32, %arg1 : i32, i32
  }
  func.func @transform_2(%arg0: i32, %arg1: i32) -> (i32, i32) {
    %c0_i32 = arith.constant 0 : i32
    return %arg0, %arg1 : i32, i32
  }
}

</mosaic_0001>

<llo_original>
// kernel: tpu_custom_call.1
$region0: #{tpu_custom_call.1}
  #allocation0 [shape = 'u32[]', space=smem, size = 0x4, offset = 0x4, fixed_abs, tag = 'smem constant byte address 0x4 - core index']
  #allocation1 [shape = 'u32[72,128]{1,0:T(1,128)}', space=vmem, size = 0x9000, scoped, tag = 'internal scratch']
  %s0 = inlined_call_operand.hbm [shape: bf16[128,128], index: 0, kind: input, shape index: {}]
  %s1 = inlined_call_operand.hbm [shape: bf16[128,128], index: 1, kind: input, shape index: {}]
  %s2 = inlined_call_operand.hbm [shape: bf16[128,128], index: 2, kind: output, shape index: {}]
  %s3 = sld [smem:[#allocation0]]
  $region49: #{tpu_custom_call.1} parent=0
    _
  %s5 = ssub.s32 1, %s3
  %s6 = scalar_select 0, %s5, %s3
  $region1: #{tpu_custom_call.1} parent=0
    #allocation2 [shape = 'u8[32768]{0}', space=vmem, size = 0x8000, scoped, tag = 'input window, operand 0']
    #allocation3 [shape = 's32[2]{0}', space=sflag, size = 0x8, scoped, tag = 'scoped memory for tpu_custom_call.1']
    #allocation4 [shape = 's32[2]{0}', space=sflag, size = 0x8, scoped, tag = 'scoped memory for tpu_custom_call.1']
    #allocation5 [shape = 'u8[32768]{0}', space=vmem, size = 0x8000, scoped, tag = 'input window, operand 1, single buffered']
    #allocation6 [shape = 's32[1]{0}', space=sflag, size = 0x4, scoped, tag = 'scoped memory for tpu_custom_call.1']
    #allocation7 [shape = 'u8[32768]{0}', space=vmem, size = 0x8000, scoped, tag = 'output window, operand 0']
    %7 = vsyncpa [#allocation3], 0
    %s8 = scalar_lea.sflag [#allocation3], 1
    %9 = vsyncpa %s8, 0
    %10 = vsyncpa [#allocation6], 0
    %11 = vsyncpa [#allocation4], 0
    %s12 = scalar_lea.sflag [#allocation4], 1
    %13 = vsyncpa %s12, 0
    loop: start=0, step=1, limit=4
    $region2: #{tpu_custom_call.1} parent=1 // loop_pre_header
      _
    $region3: #{tpu_custom_call.1} parent=1 // loop_header
      %s15 = sphi 0, %s19
      %p16 = scmp.ge.s32.totalorder %s15, 4
      %s22 = sphi 0, %s34
      %s23 = sphi 0, %s30
      %s24 = sphi 0, %s22
      %s25 = sphi 0, %s23
      %s26 = sphi 0, %s24
      %s27 = sphi 0, %s25
      %s37 = sphi 0, %s39
      %s40 = sphi 0, %s37
      %s41 = sphi 0, %s40
      %s57 = sphi 0, %s41
      %s63 = sphi 0, %s65
      %s66 = sphi 0, %s63
      %s67 = sphi 0, %s66
      %s83 = sphi 0, %s67
      %s91 = sphi 0, %s93
      %s94 = sphi 0, %s91
      %s95 = sphi 0, %s94
      %s111 = sphi 0, %s95
    $region4: #{tpu_custom_call.1} parent=1 // loop_header_branch
      %18 = sbr.rel (%p16) target = $region8
    $region5: #{tpu_custom_call.1} parent=1 // loop_body
      %s20 = ssub.s32 %s15, 1
      %s21 = ssub.s32 %s15, 2
      %s28 = sadd.s32 1, %s23
      %p29 = scmp.ge.s32.totalorder %s28, 1
      %s30 = scalar_select %p29, 0, %s28
      %s31 = sadd.s32 1, %s22
      %s32 = scalar_select %p29, %s31, %s22
      %p33 = scmp.ge.s32.totalorder %s32, 2
      %s34 = scalar_select %p33, 0, %s32
      %s35 = ssub.s32 %s22, %s34
      %p36 = scmp.eq.s32.totalorder %s35, 0
      %s38 = sadd.s32 %s37, 1
      %s39 = scalar_select %p36, %s37, %s38
      %p42 = pneg %p36
      %p43 = scmp.eq.s32.totalorder %s15, 1
      %p44 = por %p42, %p43
      %p45 = scmp.ne.s32.totalorder %s37, %s40
      %p46 = scmp.eq.s32.totalorder %s15, 0
      %p47 = por %p45, %p46
      %p48 = scmp.ne.s32.totalorder %s37, %s40
      %p49 = scmp.eq.s32.totalorder %s20, 1
      %p50 = por %p48, %p49
      %p51 = scmp.ne.s32.totalorder %s40, %s41
      %p52 = scmp.eq.s32.totalorder %s20, 0
      %p53 = por %p51, %p52
      %p54 = scmp.ne.s32.totalorder %s40, %s41
      %p55 = scmp.eq.s32.totalorder %s21, 1
      %p56 = por %p54, %p55
      %p58 = scmp.ne.s32.totalorder %s41, %s57
      %p59 = scmp.eq.s32.totalorder %s21, 0
      %p60 = por %p58, %p59
      %s61 = ssub.s32 %s23, %s30
      %p62 = scmp.eq.s32.totalorder %s61, 0
      %s64 = sadd.s32 %s63, 1
      %s65 = scalar_select %p62, %s63, %s64
      %p68 = pneg %p62
      %p69 = scmp.eq.s32.totalorder %s15, 1
      %p70 = por %p68, %p69
      %p71 = scmp.ne.s32.totalorder %s63, %s66
      %p72 = scmp.eq.s32.totalorder %s15, 0
      %p73 = por %p71, %p72
      %p74 = scmp.ne.s32.totalorder %s63, %s66
      %p75 = scmp.eq.s32.totalorder %s20, 1
      %p76 = por %p74, %p75
      %p77 = scmp.ne.s32.totalorder %s66, %s67
      %p78 = scmp.eq.s32.totalorder %s20, 0
      %p79 = por %p77, %p78
      %p80 = scmp.ne.s32.totalorder %s66, %s67
      %p81 = scmp.eq.s32.totalorder %s21, 1
      %p82 = por %p80, %p81
      %p84 = scmp.ne.s32.totalorder %s67, %s83
      %p85 = scmp.eq.s32.totalorder %s21, 0
      %p86 = por %p84, %p85
      %s87 = ssub.s32 %s22, %s34
      %s88 = ssub.s32 %s23, %s30
      %s89 = sor.u32 %s87, %s88
      %p90 = scmp.eq.s32.totalorder %s89, 0
      %s92 = sadd.s32 %s91, 1
      %s93 = scalar_select %p90, %s91, %s92
      %p96 = pneg %p90
      %p97 = scmp.eq.s32.totalorder %s15, 1
      %p98 = por %p96, %p97
      %p99 = scmp.ne.s32.totalorder %s91, %s94
      %p100 = scmp.eq.s32.totalorder %s15, 0
      %p101 = por %p99, %p100
      %p102 = scmp.ne.s32.totalorder %s91, %s94
      %p103 = scmp.eq.s32.totalorder %s20, 1
      %p104 = por %p102, %p103
      %p105 = scmp.ne.s32.totalorder %s94, %s95
      %p106 = scmp.eq.s32.totalorder %s20, 0
      %p107 = por %p105, %p106
      %p108 = scmp.ne.s32.totalorder %s94, %s95
      %p109 = scmp.eq.s32.totalorder %s21, 1
      %p110 = por %p108, %p109
      %p112 = scmp.ne.s32.totalorder %s95, %s111
      %p113 = scmp.eq.s32.totalorder %s21, 0
      %p114 = por %p112, %p113
      %p115 = scmp.le.s32.totalorder 1, %s15
      %p116 = scmp.lt.s32.totalorder %s15, 3
      %p117 = pnand %p115, %p116
      %p118 = pneg %p117
      // Predicated region
      $region9: #{tpu_custom_call.1} parent=5 // pred_check
        _
      $region10: #{tpu_custom_call.1} parent=5 // pred_check_branch
        %120 = sbr.rel (%p117) target = $region12
      $region11: #{tpu_custom_call.1} parent=5 // pred_region
        %s121 = ssub.s32 %s15, 1
        // Predicated region
        $region13: #{tpu_custom_call.1} parent=11 // pred_check
          %p122 = pneg %p79
        $region14: #{tpu_custom_call.1} parent=11 // pred_check_branch
          %124 = sbr.rel (%p122) target = $region16
        $region15: #{tpu_custom_call.1} parent=11 // pred_region
          %126 = vsyncadd [#allocation6], 0
          %s127 = smul.addr %s25, 4
          %s128 = scalar_lea.hbm %s1, %s127
          %s129 = sshll.u32 %s128, 4
          %s130 = int_to_ptr.hbm [resolvable:$true] %s129
          %s131 = sshll.u32 [#allocation5], 4
          %s132 = int_to_ptr.vmem [resolvable:$true] %s131
          %137 = dma.hbm_to_vmem [thread:$0]  %s130, 1024, %s132, [#allocation6], 64, 64, 4
        $region16: #{tpu_custom_call.1} parent=11 // pred_fallthru
          _
      $region12: #{tpu_custom_call.1} parent=5 // pred_fallthru
        _
      %p138 = scmp.lt.s32.totalorder %s15, 2
      // Predicated region
      $region17: #{tpu_custom_call.1} parent=5 // pred_check
        %p139 = pneg %p138
      $region18: #{tpu_custom_call.1} parent=5 // pred_check_branch
        %141 = sbr.rel (%p139) target = $region20
      $region19: #{tpu_custom_call.1} parent=5 // pred_region
        // Predicated region
        $region21: #{tpu_custom_call.1} parent=19 // pred_check
          %p142 = pneg %p47
        $region22: #{tpu_custom_call.1} parent=19 // pred_check_branch
          %144 = sbr.rel (%p142) target = $region24
        $region23: #{tpu_custom_call.1} parent=19 // pred_region
          %s145 = sand.u32 %s37, 1
          %s146 = scalar_lea.sflag [#allocation3], %s145
          %s147 = sand.u32 %s37, 1
          %s148 = smul.addr %s147, 32
          %s149 = scalar_lea.vmem [#allocation2], %s148
          %s150 = smul.u32 8, %s22
          %152 = vsyncadd %s146, 0
          %s153 = smul.addr %s150, 4
          %s154 = scalar_lea.hbm %s0, %s153
          %s155 = sshll.u32 %s154, 4
          %s156 = int_to_ptr.hbm [resolvable:$true] %s155
          %s157 = sshll.u32 %s149, 4
          %s158 = int_to_ptr.vmem [resolvable:$true] %s157
          %163 = dma.hbm_to_vmem [thread:$0]  %s156, 512, %s158, %s146, 64, 64, 4
        $region24: #{tpu_custom_call.1} parent=19 // pred_fallthru
          _
      $region20: #{tpu_custom_call.1} parent=5 // pred_fallthru
        _
      %p164 = scmp.le.s32.totalorder 1, %s15
      %p165 = scmp.lt.s32.totalorder %s15, 3
      %p166 = pnand %p164, %p165
      %p167 = pneg %p166
      // Predicated region
      $region25: #{tpu_custom_call.1} parent=5 // pred_check
        _
      $region26: #{tpu_custom_call.1} parent=5 // pred_check_branch
        %169 = sbr.rel (%p166) target = $region28
      $region27: #{tpu_custom_call.1} parent=5 // pred_region
        %s170 = ssub.s32 %s15, 1
        %s171 = sand.u32 %s40, 1
        %s172 = scalar_lea.sflag [#allocation3], %s171
        %s173 = sand.u32 %s40, 1
        %s174 = smul.addr %s173, 32
        %s175 = scalar_lea.vmem [#allocation2], %s174
        // Predicated region
        $region29: #{tpu_custom_call.1} parent=27 // pred_check
          %p176 = pneg %p53
        $region30: #{tpu_custom_call.1} parent=27 // pred_check_branch
          %178 = sbr.rel (%p176) target = $region32
        $region31: #{tpu_custom_call.1} parent=27 // pred_region
          %180 = dma.done %s172, 512
        $region32: #{tpu_custom_call.1} parent=27 // pred_fallthru
          _
        // Predicated region
        $region33: #{tpu_custom_call.1} parent=27 // pred_check
          %p181 = pneg %p79
        $region34: #{tpu_custom_call.1} parent=27 // pred_check_branch
          %183 = sbr.rel (%p181) target = $region36
        $region35: #{tpu_custom_call.1} parent=27 // pred_region
          %185 = dma.done [#allocation6], 1024
        $region36: #{tpu_custom_call.1} parent=27 // pred_fallthru
          _
        %s186 = sand.u32 %s40, 1
        %s187 = scalar_lea.sflag [#allocation3], %s186
        %s188 = sand.u32 %s40, 1
        %s189 = smul.addr %s188, 32
        %s190 = scalar_lea.vmem [#allocation2], %s189
        %p191 = pneg %p53
        %p192 = pneg %p50
        %p193 = pneg %p79
        %p194 = pneg %p76
        %p195 = pneg %p107
        %p196 = pneg %p104
        %s197 = sand.u32 %s94, 1
        %s198 = scalar_lea.sflag [#allocation4], %s197
        %s199 = sand.u32 %s94, 1
        %s200 = smul.addr %s199, 32
        %s201 = scalar_lea.vmem [#allocation7], %s200
        %s202 = smul.u32 8, %s24
        %s203 = smul.u32 8, %s24
        %v204 = vld [vmem:[%s175] sm:$0xf]
        %v205 = vld [vmem:[%s175 + $0x4] sm:$0xf]
        %v206 = vld [vmem:[%s175 + $0x8] sm:$0xf]
        %v207 = vld [vmem:[%s175 + $0xc] sm:$0xf]
        %v208 = vld [vmem:[%s175 + $0x10] sm:$0xf]
        %v209 = vld [vmem:[%s175 + $0x14] sm:$0xf]
        %v210 = vld [vmem:[%s175 + $0x18] sm:$0xf]
        %v211 = vld [vmem:[%s175 + $0x1c] sm:$0xf]
        %v212 = vld [vmem:[#allocation5] sm:$0xf]
        %v213 = vld [vmem:[#allocation5 + $0x4] sm:$0xf]
        %v214 = vld [vmem:[#allocation5 + $0x8] sm:$0xf]
        %v215 = vld [vmem:[#allocation5 + $0xc] sm:$0xf]
        %v216 = vld [vmem:[#allocation5 + $0x10] sm:$0xf]
        %v217 = vld [vmem:[#allocation5 + $0x14] sm:$0xf]
        %v218 = vld [vmem:[#allocation5 + $0x18] sm:$0xf]
        %v219 = vld [vmem:[#allocation5 + $0x1c] sm:$0xf]
        %v220 = vld [vmem:[#allocation5 + $0x20] sm:$0xf]
        %v221 = vld [vmem:[#allocation5 + $0x24] sm:$0xf]
        %v222 = vld [vmem:[#allocation5 + $0x28] sm:$0xf]
        %v223 = vld [vmem:[#allocation5 + $0x2c] sm:$0xf]
        %v224 = vld [vmem:[#allocation5 + $0x30] sm:$0xf]
        %v225 = vld [vmem:[#allocation5 + $0x34] sm:$0xf]
        %v226 = vld [vmem:[#allocation5 + $0x38] sm:$0xf]
        %v227 = vld [vmem:[#allocation5 + $0x3c] sm:$0xf]
        %v236 = vunpack.c.l.b16 %v204
        %v237 = vunpack.c.l.b16 %v205
        %v238 = vunpack.c.l.b16 %v206
        %v239 = vunpack.c.l.b16 %v207
        %v240 = vunpack.c.l.b16 %v208
        %v241 = vunpack.c.l.b16 %v209
        %v242 = vunpack.c.l.b16 %v210
        %v243 = vunpack.c.l.b16 %v211
        %v244 = vpack.c.b16 %v237, %v236
        %v245 = vpack.c.b16 %v239, %v238
        %v246 = vpack.c.b16 %v241, %v240
        %v247 = vpack.c.b16 %v243, %v242
        %v268 = vunpack.c.l.b16 %v212
        %v269 = vunpack.c.l.b16 %v213
        %v270 = vunpack.c.l.b16 %v214
        %v271 = vunpack.c.l.b16 %v215
        %v272 = vunpack.c.l.b16 %v216
        %v273 = vunpack.c.l.b16 %v217
        %v274 = vunpack.c.l.b16 %v218
        %v275 = vunpack.c.l.b16 %v219
        %v276 = vunpack.c.l.b16 %v220
        %v277 = vunpack.c.l.b16 %v221
        %v278 = vunpack.c.l.b16 %v222
        %v279 = vunpack.c.l.b16 %v223
        %v280 = vunpack.c.l.b16 %v224
        %v281 = vunpack.c.l.b16 %v225
        %v282 = vunpack.c.l.b16 %v226
        %v283 = vunpack.c.l.b16 %v227
        %v284 = vpack.c.b16 %v269, %v268
        %v285 = vpack.c.b16 %v271, %v270
        %v286 = vpack.c.b16 %v273, %v272
        %v287 = vpack.c.b16 %v275, %v274
        %v288 = vpack.c.b16 %v277, %v276
        %v289 = vpack.c.b16 %v279, %v278
        %v290 = vpack.c.b16 %v281, %v280
        %v291 = vpack.c.b16 %v283, %v282
        %300 = vmatpush.bf16.msra.mxu0 %v291
        %301 = vmatpush.bf16.msra.mxu0 %v290
        %302 = vmatpush.bf16.msra.mxu0 %v289
        %303 = vmatpush.bf16.msra.mxu0 %v288
        %304 = vmatpush.bf16.msra.mxu0 %v287
        %305 = vmatpush.bf16.msra.mxu0 %v286
        %306 = vmatpush.bf16.msra.mxu0 %v285
        %307 = vmatpush.bf16.msra.mxu0 %v284
        %308 = vmatmul.bf16.gmra.mxu0 %v244
        %v309 = vpop.f32.mrf.mxu0
        %v310 = vadd.f32 0.0, %v309
        %v311 = vpop.f32.mrf.mxu0
        %v312 = vadd.f32 0.0, %v311
        %313 = vmatmul.bf16.gmra.mxu0 %v245
        %v314 = vpop.f32.mrf.mxu0
        %v315 = vadd.f32 0.0, %v314
        %v316 = vpop.f32.mrf.mxu0
        %v317 = vadd.f32 0.0, %v316
        %318 = vmatmul.bf16.gmra.mxu0 %v246
        %v319 = vpop.f32.mrf.mxu0
        %v320 = vadd.f32 0.0, %v319
        %v321 = vpop.f32.mrf.mxu0
        %v322 = vadd.f32 0.0, %v321
        %323 = vmatmul.bf16.gmra.mxu0 %v247
        %v324 = vpop.f32.mrf.mxu0
        %v325 = vadd.f32 0.0, %v324
        %v326 = vpop.f32.mrf.mxu0
        %v327 = vadd.f32 0.0, %v326
        %328 = vdwg.mxu0
        %v329 = vpack.c.bf16 %v310, %v310
        %v330 = vpack.c.bf16 %v312, %v312
        %v331 = vpack.c.bf16 %v315, %v315
        %v332 = vpack.c.bf16 %v317, %v317
        %v333 = vpack.c.bf16 %v320, %v320
        %v334 = vpack.c.bf16 %v322, %v322
        %v335 = vpack.c.bf16 %v325, %v325
        %v336 = vpack.c.bf16 %v327, %v327
        %337 = vst [vmem:[%s201] sm:$0xf] %v329
        %338 = vst [vmem:[%s201 + $0x4] sm:$0xf] %v330
        %339 = vst [vmem:[%s201 + $0x8] sm:$0xf] %v331
        %340 = vst [vmem:[%s201 + $0xc] sm:$0xf] %v332
        %341 = vst [vmem:[%s201 + $0x10] sm:$0xf] %v333
        %342 = vst [vmem:[%s201 + $0x14] sm:$0xf] %v334
        %343 = vst [vmem:[%s201 + $0x18] sm:$0xf] %v335
        %344 = vst [vmem:[%s201 + $0x1c] sm:$0xf] %v336
        %s345 = sand.u32 %s94, 1
        %s346 = scalar_lea.sflag [#allocation4], %s345
        %s347 = sand.u32 %s94, 1
        %s348 = smul.addr %s347, 32
        %s349 = scalar_lea.vmem [#allocation7], %s348
        // Predicated region
        $region37: #{tpu_custom_call.1} parent=27 // pred_check
          %p350 = pneg %p104
        $region38: #{tpu_custom_call.1} parent=27 // pred_check_branch
          %352 = sbr.rel (%p350) target = $region40
        $region39: #{tpu_custom_call.1} parent=27 // pred_region
          %s353 = smul.u32 8, %s24
          %355 = vsyncadd %s346, 0
          %s356 = sadd.s32 %s25, %s353
          %s357 = smul.addr %s356, 4
          %s358 = scalar_lea.hbm %s2, %s357
          %s359 = sshll.u32 %s349, 4
          %s360 = int_to_ptr.vmem [resolvable:$true] %s359
          %s361 = sshll.u32 %s358, 4
          %s362 = int_to_ptr.hbm [resolvable:$true] %s361
          %367 = dma.vmem_to_hbm [thread:$0]  %s360, 512, %s362, %s346, 64, 64, 4
        $region40: #{tpu_custom_call.1} parent=27 // pred_fallthru
          _
      $region28: #{tpu_custom_call.1} parent=5 // pred_fallthru
        _
      %p368 = scmp.le.s32.totalorder 2, %s15
      // Predicated region
      $region41: #{tpu_custom_call.1} parent=5 // pred_check
        %p369 = pneg %p368
      $region42: #{tpu_custom_call.1} parent=5 // pred_check_branch
        %371 = sbr.rel (%p369) target = $region44
      $region43: #{tpu_custom_call.1} parent=5 // pred_region
        %s372 = ssub.s32 %s15, 2
        // Predicated region
        $region45: #{tpu_custom_call.1} parent=43 // pred_check
          %p373 = pneg %p110
        $region46: #{tpu_custom_call.1} parent=43 // pred_check_branch
          %375 = sbr.rel (%p373) target = $region48
        $region47: #{tpu_custom_call.1} parent=43 // pred_region
          %s376 = sand.u32 %s95, 1
          %s377 = scalar_lea.sflag [#allocation4], %s376
          %s378 = sand.u32 %s95, 1
          %s379 = smul.addr %s378, 32
          %s380 = scalar_lea.vmem [#allocation7], %s379
          %382 = dma.done %s377, 512
        $region48: #{tpu_custom_call.1} parent=43 // pred_fallthru
          _
      $region44: #{tpu_custom_call.1} parent=5 // pred_fallthru
        _
    $region6: #{tpu_custom_call.1} parent=1 // loop_footer
      %s19 = sadd.s32 1, %s15
    $region7: #{tpu_custom_call.1} parent=1 // loop_footer_branch
      %14 = sbr.rel target = $region3
    $region8: #{tpu_custom_call.1} parent=1 // loop_exit
      _
    %383 = vsyncpa [#allocation3], 1
    %s384 = scalar_lea.sflag [#allocation3], 1
    %385 = vsyncpa %s384, 1
    %386 = vsyncpa [#allocation6], 1
    %387 = vsyncpa [#allocation4], 1
    %s388 = scalar_lea.sflag [#allocation4], 1
    %389 = vsyncpa %s388, 1

</llo_original>
